<compile_context>
chip_gen: v7x
topology: tpu7x:2x2x1
jax: 0.10.0
libtpu: 0.0.40
codegen_flags: <defaults>
</compile_context>

<pallas_src>
import math

import jax
import jax.numpy as jnp
from jax.experimental import pallas as pl
from jax.experimental.pallas import tpu as pltpu


# Taylor coefficients (in z = r**2) of sin(pi*r)/r and cos(pi*r); for |r| <= 0.5
# the truncation error is ~6e-8 (sin) / ~1e-8 (cos).
_SIN_PI_COEFFS = tuple(
    (-1.0) ** k * math.pi ** (2 * k + 1) / math.factorial(2 * k + 1) for k in range(6)
)
_COS_PI_COEFFS = tuple(
    (-1.0) ** k * math.pi ** (2 * k) / math.factorial(2 * k) for k in range(7)
)


def _poly_eval(z, coeffs):
    """Horner evaluation in z; coeffs ordered low -> high power (trace-time unroll)."""
    acc = coeffs[-1]
    for c in reversed(coeffs[:-1]):
        acc = acc * z + c
    return acc


def _sinusoidal_pe_kernel(x_ref, w_ref, o_ref):
    # x_ref: (TB, 1), w_ref: (1, D), o_ref: (TB, 1 + 2*D) ordered [x | sin | cos].
    d = w_ref.shape[-1]
    x = x_ref[...]                       # (TB, 1)
    w = w_ref[...]                       # (1, D)

    # Period-1 trick: work in "turns" t = x*w so sin(2*pi*x*w) = sin(2*pi*r)
    # with r = t - nearest_int(t) in [-0.5, 0.5]; the reduction is a single
    # add/floor/sub (exact in f32) instead of two full library range reductions.
    t = x * w                            # (TB, D) rank-1 broadcast (VPU; not a matmul)
    r = t - jnp.floor(t + 0.5)           # fractional turns in [-0.5, 0.5]
    z = r * r

    s = r * _poly_eval(z, _SIN_PI_COEFFS)    # sin(pi*r)
    c = _poly_eval(z, _COS_PI_COEFFS)        # cos(pi*r)
    sin2 = 2.0 * (s * c)                     # sin(2*pi*t) via double angle
    cos2 = 1.0 - 2.0 * (s * s)               # cos(2*pi*t)

    # Direct stores of the torch-ordered row. Offsets 1 and 1+D are masked lane
    # stores; accepted in exchange for eliminating the wrapper concat's extra
    # HBM round trip on the dominant (B, 1+2D) tensor.
    o_ref[:, 0:1] = x.astype(o_ref.dtype)
    o_ref[:, 1:1 + d] = sin2.astype(o_ref.dtype)
    o_ref[:, 1 + d:] = cos2.astype(o_ref.dtype)


def _cdiv(a: int, b: int) -> int:
    return -(-a // b)


def _round_up(a: int, m: int) -> int:
    return _cdiv(a, m) * m


def sinusoidal_positional_embedding(
    x: jax.Array, weights: jax.Array, *, block_b: int = 512
) -> jax.Array:
    """x: (B,) float, weights: (H/2,) float -> (B, 1 + H) float32, [x | sin | cos]."""
    assert x.ndim == 1
    assert weights.ndim == 1
    b = x.shape[0]
    d = weights.shape[0]
    out_w = 1 + 2 * d

    x2 = x.reshape(b, 1).astype(jnp.float32)
    w2 = weights.reshape(1, d).astype(jnp.float32)

    # --- batch tile size ---------------------------------------------------
    # (a) VMEM: double-buffered output tile + double-buffered lane-padded x
    #     tile must stay well under the smallest default scoped-VMEM budget
    #     (v5e: 16 MiB, v7x: 32 MiB).  Target ~8 MiB total.
    bytes_per_row = 2 * out_w * 4 + 2 * 128 * 4
    vmem_budget = 8 * 1024 * 1024
    tb_vmem = max(8, (vmem_budget // bytes_per_row) // 8 * 8)
    # (b) Megacore (v7x): make sure the grid has >= 2 blocks when the batch is
    #     big enough, so both TensorCores get work.
    tb_two_core = max(8, _round_up(_cdiv(b, 2), 8))
    tb = min(block_b, tb_vmem, tb_two_core)
    if tb >= b:
        tb = b  # single full block (always a legal block shape)

    grid = (_cdiv(b, tb),)

    return pl.pallas_call(
        _sinusoidal_pe_kernel,
        out_shape=jax.ShapeDtypeStruct((b, out_w), jnp.float32),
        grid=grid,
        in_specs=[
            pl.BlockSpec((tb, 1), lambda i: (i, 0)),
            pl.BlockSpec((1, d), lambda i: (0, 0)),
        ],
        out_specs=pl.BlockSpec((tb, out_w), lambda i: (i, 0)),
        compiler_params=pltpu.CompilerParams(
            dimension_semantics=("parallel",),
        ),
    )(x2, w2)


def _reference(x, weights):
    freqs = x[:, None] * weights[None, :] * 2.0 * math.pi
    return jnp.concatenate([x[:, None], jnp.sin(freqs), jnp.cos(freqs)], axis=-1)


if __name__ == "__main__":
    hidden_size = 32  # must be even
    batch = 8

    key = jax.random.PRNGKey(0)
    k_x, k_w = jax.random.split(key)

    # Parameter init matches torch.randn(hidden_size // 2) in shape/distribution.
    weights = jax.random.normal(k_w, (hidden_size // 2,), dtype=jnp.float32)
    # Diffusion-style scalar timesteps in [0, 1).
    x = jax.random.uniform(k_x, (batch,), dtype=jnp.float32)

    out = jax.block_until_ready(sinusoidal_positional_embedding(x, weights))
    ref = _reference(x, weights)

    assert out.shape == (batch, 1 + hidden_size), out.shape
    # The kernel's period-1 reduction + short polynomials agree with the library
    # sin/cos reference to well below 1e-5 at these magnitudes; use a slightly
    # relaxed atol to absorb f32 argument-rounding differences.
    err = float(jnp.max(jnp.abs(out - ref)))
    assert jnp.allclose(out, ref, atol=1e-4, rtol=1e-5), err

    print("KERNEL_OK")
</pallas_src>

<mosaic_0001>
module attributes {stable_mosaic.version = 11 : i64} {
  func.func @_sinusoidal_pe_kernel(%arg0: i32, %arg1: memref<8x1xf32, #tpu.memory_space<vmem>>, %arg2: memref<1x16xf32, #tpu.memory_space<vmem>>, %arg3: memref<8x33xf32, #tpu.memory_space<vmem>>) attributes {dimension_semantics = [#tpu.dimension_semantics<parallel>], iteration_bounds = array<i64: 1>, scalar_prefetch = 0 : i64, scratch_operands = 0 : i64, tpu.core_type = #tpu.core_type<tc>, window_params = [{transform_indices = @transform_0, window_bounds = array<i64: 8, 1>}, {pipeline_mode = #tpu.pipeline_mode<synchronous>, transform_indices = @transform_1, window_bounds = array<i64: 1, 16>}, {transform_indices = @transform_2, window_bounds = array<i64: 8, 33>}]} {
    %c0 = arith.constant 0 : index
    %c0_0 = arith.constant 0 : index
    %0 = vector.load %arg1[%c0, %c0_0] : memref<8x1xf32, #tpu.memory_space<vmem>>, vector<8x1xf32>
    %c0_1 = arith.constant 0 : index
    %c0_2 = arith.constant 0 : index
    %1 = vector.load %arg2[%c0_1, %c0_2] : memref<1x16xf32, #tpu.memory_space<vmem>>, vector<1x16xf32>
    %2 = vector.broadcast %0 : vector<8x1xf32> to vector<8x16xf32>
    %3 = vector.broadcast %1 : vector<1x16xf32> to vector<8x16xf32>
    %4 = arith.mulf %2, %3 : vector<8x16xf32>
    %cst = arith.constant 5.000000e-01 : f32
    %5 = vector.broadcast %cst : f32 to vector<8x16xf32>
    %6 = arith.addf %4, %5 : vector<8x16xf32>
    %7 = math.floor %6 : vector<8x16xf32>
    %8 = arith.subf %4, %7 : vector<8x16xf32>
    %9 = arith.mulf %8, %8 : vector<8x16xf32>
    %cst_3 = arith.constant -0.00737043098 : f32
    %10 = vector.broadcast %cst_3 : f32 to vector<8x16xf32>
    %11 = arith.mulf %10, %9 : vector<8x16xf32>
    %cst_4 = arith.constant 0.0821458846 : f32
    %12 = vector.broadcast %cst_4 : f32 to vector<8x16xf32>
    %13 = arith.addf %11, %12 : vector<8x16xf32>
    %14 = arith.mulf %13, %9 : vector<8x16xf32>
    %cst_5 = arith.constant -0.599264503 : f32
    %15 = vector.broadcast %cst_5 : f32 to vector<8x16xf32>
    %16 = arith.addf %14, %15 : vector<8x16xf32>
    %17 = arith.mulf %16, %9 : vector<8x16xf32>
    %cst_6 = arith.constant 2.55016398 : f32
    %18 = vector.broadcast %cst_6 : f32 to vector<8x16xf32>
    %19 = arith.addf %17, %18 : vector<8x16xf32>
    %20 = arith.mulf %19, %9 : vector<8x16xf32>
    %cst_7 = arith.constant -5.16771269 : f32
    %21 = vector.broadcast %cst_7 : f32 to vector<8x16xf32>
    %22 = arith.addf %20, %21 : vector<8x16xf32>
    %23 = arith.mulf %22, %9 : vector<8x16xf32>
    %cst_8 = arith.constant 3.14159274 : f32
    %24 = vector.broadcast %cst_8 : f32 to vector<8x16xf32>
    %25 = arith.addf %23, %24 : vector<8x16xf32>
    %26 = arith.mulf %8, %25 : vector<8x16xf32>
    %cst_9 = arith.constant 0.0019295743 : f32
    %27 = vector.broadcast %cst_9 : f32 to vector<8x16xf32>
    %28 = arith.mulf %27, %9 : vector<8x16xf32>
    %cst_10 = arith.constant -0.0258068908 : f32
    %29 = vector.broadcast %cst_10 : f32 to vector<8x16xf32>
    %30 = arith.addf %28, %29 : vector<8x16xf32>
    %31 = arith.mulf %30, %9 : vector<8x16xf32>
    %cst_11 = arith.constant 0.235330626 : f32
    %32 = vector.broadcast %cst_11 : f32 to vector<8x16xf32>
    %33 = arith.addf %31, %32 : vector<8x16xf32>
    %34 = arith.mulf %33, %9 : vector<8x16xf32>
    %cst_12 = arith.constant -1.33526278 : f32
    %35 = vector.broadcast %cst_12 : f32 to vector<8x16xf32>
    %36 = arith.addf %34, %35 : vector<8x16xf32>
    %37 = arith.mulf %36, %9 : vector<8x16xf32>
    %cst_13 = arith.constant 4.05871201 : f32
    %38 = vector.broadcast %cst_13 : f32 to vector<8x16xf32>
    %39 = arith.addf %37, %38 : vector<8x16xf32>
    %40 = arith.mulf %39, %9 : vector<8x16xf32>
    %cst_14 = arith.constant -4.93480206 : f32
    %41 = vector.broadcast %cst_14 : f32 to vector<8x16xf32>
    %42 = arith.addf %40, %41 : vector<8x16xf32>
    %43 = arith.mulf %42, %9 : vector<8x16xf32>
    %cst_15 = arith.constant 1.000000e+00 : f32
    %44 = vector.broadcast %cst_15 : f32 to vector<8x16xf32>
    %45 = arith.addf %43, %44 : vector<8x16xf32>
    %46 = arith.mulf %26, %45 : vector<8x16xf32>
    %cst_16 = arith.constant 2.000000e+00 : f32
    %47 = vector.broadcast %cst_16 : f32 to vector<8x16xf32>
    %48 = arith.mulf %47, %46 : vector<8x16xf32>
    %49 = arith.mulf %26, %26 : vector<8x16xf32>
    %cst_17 = arith.constant 2.000000e+00 : f32
    %50 = vector.broadcast %cst_17 : f32 to vector<8x16xf32>
    %51 = arith.mulf %50, %49 : vector<8x16xf32>
    %cst_18 = arith.constant 1.000000e+00 : f32
    %52 = vector.broadcast %cst_18 : f32 to vector<8x16xf32>
    %53 = arith.subf %52, %51 : vector<8x16xf32>
    %c0_19 = arith.constant 0 : index
    %c0_20 = arith.constant 0 : index
    %54 = vector.load %arg3[%c0_19, %c0_20] : memref<8x33xf32, #tpu.memory_space<vmem>>, vector<8x1xf32>
    tpu.vector_store %arg3[%c0_19, %c0_20], %0 {strides = array<i32>} : memref<8x33xf32, #tpu.memory_space<vmem>>, vector<8x1xf32>,
    %c0_21 = arith.constant 0 : index
    %c1 = arith.constant 1 : index
    %55 = vector.load %arg3[%c0_21, %c1] : memref<8x33xf32, #tpu.memory_space<vmem>>, vector<8x16xf32>
    tpu.vector_store %arg3[%c0_21, %c1], %48 {strides = array<i32>} : memref<8x33xf32, #tpu.memory_space<vmem>>, vector<8x16xf32>,
    %c0_22 = arith.constant 0 : index
    %c17 = arith.constant 17 : index
    %56 = vector.load %arg3[%c0_22, %c17] : memref<8x33xf32, #tpu.memory_space<vmem>>, vector<8x16xf32>
    tpu.vector_store %arg3[%c0_22, %c17], %53 {strides = array<i32>} : memref<8x33xf32, #tpu.memory_space<vmem>>, vector<8x16xf32>,
    return
  }
  func.func @transform_0(%arg0: i32) -> (i32, i32) {
    %c0_i32 = arith.constant 0 : i32
    %c0_i32_0 = arith.constant 0 : i32
    return %arg0, %c0_i32 : i32, i32
  }
  func.func @transform_1(%arg0: i32) -> (i32, i32) {
    %c0_i32 = arith.constant 0 : i32
    %c0_i32_0 = arith.constant 0 : i32
    %c0_i32_1 = arith.constant 0 : i32
    return %c0_i32, %c0_i32_0 : i32, i32
  }
  func.func @transform_2(%arg0: i32) -> (i32, i32) {
    %c0_i32 = arith.constant 0 : i32
    %c0_i32_0 = arith.constant 0 : i32
    return %arg0, %c0_i32 : i32, i32
  }
}

</mosaic_0001>

<llo_original>
// kernel: tpu_custom_call.1
$region0: #{tpu_custom_call.1}
  #allocation0 [shape = 'u32[]', space=smem, size = 0x4, offset = 0x4, fixed_abs, tag = 'smem constant byte address 0x4 - core index']
  #allocation1 [shape = 'u32[144,128]{1,0:T(1,128)}', space=vmem, size = 0x12000, scoped, tag = 'internal scratch']
  %s0 = inlined_call_operand.vmem [shape: f32[8,1], index: 0, kind: input, shape index: {}]
  %s1 = inlined_call_operand.vmem [shape: f32[1,16], index: 1, kind: input, shape index: {}]
  %s2 = inlined_call_operand.hbm [shape: f32[8,33], index: 2, kind: output, shape index: {}]
  %s3 = sld [smem:[#allocation0]]
  $region18: #{tpu_custom_call.1} parent=0
    _
  %s5 = ssub.s32 1, %s3
  %s6 = scalar_select 0, %s5, %s3
  $region1: #{tpu_custom_call.1} parent=0
    #allocation2 [shape = 'u8[4096]{0}', space=vmem, size = 0x1000, scoped, tag = 'output window, operand 0, single buffered']
    #allocation3 [shape = 's32[1]{0}', space=sflag, size = 0x4, scoped, tag = 'scoped memory for tpu_custom_call.1']
    %7 = vsyncpa [#allocation3], 0
    // Predicated region
    $region2: #{tpu_custom_call.1} parent=1 // pred_check
      _
    $region3: #{tpu_custom_call.1} parent=1 // pred_check_branch
      %9 = sbr.rel (0) target = $region5
    $region4: #{tpu_custom_call.1} parent=1 // pred_region
      _
    $region5: #{tpu_custom_call.1} parent=1 // pred_fallthru
      _
    // Predicated region
    $region6: #{tpu_custom_call.1} parent=1 // pred_check
      _
    $region7: #{tpu_custom_call.1} parent=1 // pred_check_branch
      %11 = sbr.rel (0) target = $region9
    $region8: #{tpu_custom_call.1} parent=1 // pred_region
      _
    $region9: #{tpu_custom_call.1} parent=1 // pred_fallthru
      _
    %v12 = vld [vmem:[%s0] sm:$0xff]
    %v13 = vld [vmem:[%s1] sm:$0x1]
    %15 = vset.pattern.permute.xlu0 0
    %16 = vperm.xlu0 %15, %v12
    %v17 = vpop.permute.xlu0 %16
    %v20 = vlaneseq
    %v21 = vshrl.u32 %v20, 7
    %v22 = vsub.s32 0, %v21
    %v23 = vrot.slane %v13, %v22
    %v25 = vmul.f32 %v17, %v23
    %v26 = vadd.f32 %v25, 0.5
    %v27 = vfloor.f32 %v26
    %v28 = vsub.f32 %v25, %v27
    %v29 = vmul.f32 %v28, %v28
    %v30 = vmul.f32 %v29, -0.007370431
    %v31 = vadd.f32 %v30, 0.082145885
    %v32 = vmul.f32 %v31, %v29
    %v33 = vadd.f32 %v32, -0.5992645
    %v34 = vmul.f32 %v33, %v29
    %v35 = vadd.f32 %v34, 2.550164
    %v36 = vmul.f32 %v35, %v29
    %v37 = vadd.f32 %v36, -5.1677127
    %v38 = vmul.f32 %v37, %v29
    %v39 = vadd.f32 %v38, 3.1415927
    %v40 = vmul.f32 %v28, %v39
    %v41 = vmul.f32 %v29, 0.0019295743
    %v42 = vadd.f32 %v41, -0.02580689
    %v43 = vmul.f32 %v42, %v29
    %v44 = vadd.f32 %v43, 0.23533063
    %v45 = vmul.f32 %v44, %v29
    %v46 = vadd.f32 %v45, -1.3352628
    %v47 = vmul.f32 %v46, %v29
    %v48 = vadd.f32 %v47, 4.058712
    %v49 = vmul.f32 %v48, %v29
    %v50 = vadd.f32 %v49, -4.934802
    %v51 = vmul.f32 %v50, %v29
    %v52 = vadd.f32 %v51, 1.0
    %v53 = vmul.f32 %v40, %v52
    %v54 = vmul.f32 %v53, 2.0
    %v55 = vmul.f32 %v40, %v40
    %v56 = vmul.f32 %v55, 2.0
    %v57 = vsub.f32 1.0, %v56
    %vm58 = vcmask 7168
    %59 = vst.msk [vmem:[#allocation2] sm:$0xff] %vm58, %v12
    %61 = vrot.lane.b32.xlu0 %v54, 1
    %v62 = vpop.permute.xlu0 %61
    %vm64 = vcmask 138248
    %65 = vst.msk [vmem:[#allocation2] sm:$0xff] %vm64, %v62
    %67 = vrot.lane.b32.xlu0 %v57, 17
    %v68 = vpop.permute.xlu0 %67
    %vm70 = vcmask 269448
    %71 = vst.msk [vmem:[#allocation2] sm:$0xff] %vm70, %v68
    // Predicated region
    $region10: #{tpu_custom_call.1} parent=1 // pred_check
      _
    $region11: #{tpu_custom_call.1} parent=1 // pred_check_branch
      %73 = sbr.rel (0) target = $region13
    $region12: #{tpu_custom_call.1} parent=1 // pred_region
      %s75 = ssub.s32 128, 128
      %76 = vsyncadd [#allocation3], %s75
      %s78 = sshll.u32 [#allocation2], 4
      %s79 = int_to_ptr.vmem [resolvable:$true] %s78
      %81 = dma.vmem_to_hbm [thread:$0]  %s79, 128, %s2, [#allocation3]
    $region13: #{tpu_custom_call.1} parent=1 // pred_fallthru
      _
    // Predicated region
    $region14: #{tpu_custom_call.1} parent=1 // pred_check
      _
    $region15: #{tpu_custom_call.1} parent=1 // pred_check_branch
      %83 = sbr.rel (0) target = $region17
    $region16: #{tpu_custom_call.1} parent=1 // pred_region
      %84 = dma.done [#allocation3], 128
    $region17: #{tpu_custom_call.1} parent=1 // pred_fallthru
      _
    %85 = vsyncpa [#allocation3], 1

</llo_original>
